<compile_context>
chip_gen: v6e
topology: v6e:2x2x1
jax: 0.10.0
libtpu: 0.0.40
codegen_flags: <defaults>
</compile_context>

<pallas_src>
import functools

import jax
import jax.numpy as jnp
from jax import lax
from jax.experimental import pallas as pl
from jax.experimental.pallas import tpu as pltpu

LANE = 128          # lane width; all minor axes padded to a multiple of this
SUBLANE = 8         # f32 sublane packing
_PAD_DIST2 = 1e30   # squared-distance filler for padded cluster columns -> Q ~ 0
VMEM_LIMIT = 32 * 1024 * 1024   # explicit scoped-VMEM limit (v6e/v7x default, made explicit)


def _round_up(x, m):
    return (x + m - 1) // m * m


# ----------------------------------------------------------------------------
# Pass 1: TAE stand-in + EUC distance + row-normalized Q + partial column sums.
# ----------------------------------------------------------------------------
def _tae_cluster_kernel(x_ref, we_ref, be_ref, wd_ref, bd_ref, ct_ref, c2_ref,
                        z_ref, xr_ref, q_ref, qcs_ref, *,
                        alpha, batch, tile_b, matmul_dtype):
    x = x_ref[...]                                               # (tb, D_pad)
    we, be = we_ref[...], be_ref[...]
    wd, bd = wd_ref[...], bd_ref[...]
    ct = ct_ref[...]                                             # (H_pad, K_pad)

    def mm(a, b):
        if matmul_dtype != jnp.float32:                          # trace-time switch
            a = a.astype(matmul_dtype)
            b = b.astype(matmul_dtype)
        return jnp.dot(a, b, preferred_element_type=jnp.float32)

    # TODO(synk): the real TAE (temporal conv + BiLSTM autoencoder) is an external
    # checkpointed module; a linear autoencoder stands in for its matmul hot path.
    z = jnp.tanh(mm(x, we) + be)                                 # (tb, H_pad), padded cols = 0
    z_ref[...] = z
    xr_ref[...] = mm(z, wd) + bd                                 # (tb, D_pad)

    # ---- ClusterNet head (z stays resident in VMEM/vregs) -------------------
    # ||z - c||^2 = ||z||^2 + ||c||^2 - 2 z.c ; ||c||^2 precomputed in the wrapper,
    # padded cluster columns carry a huge distance so Q ~ 0 there without a mask.
    z_norm2 = jnp.sum(z * z, axis=1, keepdims=True)              # (tb, 1)
    cross = mm(z, ct)                                            # (tb, K_pad), MXU
    d2 = jnp.maximum(z_norm2 + c2_ref[...] - 2.0 * cross, 0.0)   # clamp fp rounding
    sim = jnp.sqrt(d2)                                           # EUC distance

    # Student-t kernel: Q = (1 + sim/alpha)^(-(alpha+1)/2); alpha is a Python float.
    if alpha == 1.0:
        q = pl.reciprocal(1.0 + sim, approx=True)                # EUP vrcp
    else:
        q = jnp.exp((-(alpha + 1.0) / 2.0) * jnp.log1p(sim * (1.0 / alpha)))

    # Q = Q / nansum(Q, dim=1)
    qn = jnp.where(jnp.isnan(q), 0.0, q)
    q = q * pl.reciprocal(jnp.sum(qn, axis=1, keepdims=True), approx=True)
    q_ref[...] = q

    # Per-tile partial of sum(Q, dim=0); exclude padded batch rows (trace-time branch).
    if batch % tile_b != 0:
        row = lax.broadcasted_iota(jnp.int32, q.shape, 0) + pl.program_id(0) * tile_b
        q_for_sum = jnp.where(row < batch, q, 0.0)
    else:
        q_for_sum = q
    colsum = jnp.sum(q_for_sum, axis=0, keepdims=True)           # (1, K_pad)
    # Lane-dense (8, K_pad) slab: row 0 holds the partial sum, rows 1..7 are zero, so
    # pass 2 finishes the full-batch reduction with a plain sum over axis 0.
    sub = lax.broadcasted_iota(jnp.int32, qcs_ref.shape, 0)
    qcs_ref[...] = jnp.where(sub == 0, jnp.broadcast_to(colsum, qcs_ref.shape), 0.0)


# ----------------------------------------------------------------------------
# Pass 2: P = Q^2 / sum(Q, dim=0); P = P / nansum(P, dim=1).
# ----------------------------------------------------------------------------
def _p_kernel(q_ref, qcs_ref, p_ref):
    q = q_ref[...]                                               # (tb, K_pad)
    colsum = jnp.sum(qcs_ref[...], axis=0, keepdims=True)        # finish partials, (1, K_pad)
    p = (q * q) * pl.reciprocal(colsum, approx=True)
    pn = jnp.where(jnp.isnan(p), 0.0, p)
    p = p * pl.reciprocal(jnp.sum(pn, axis=1, keepdims=True), approx=True)
    p_ref[...] = p


# ----------------------------------------------------------------------------
# Wrapper
# ----------------------------------------------------------------------------
def _vmem_bytes_pass1(tb, d_pad, h_pad, k_pad):
    weights = d_pad * h_pad + h_pad + h_pad * d_pad + d_pad + h_pad * k_pad + k_pad
    tiles = tb * (2 * d_pad + h_pad + k_pad) + SUBLANE * k_pad
    return 4 * 2 * (weights + tiles)          # x2: double-buffered pipeline windows


def _pick_batch_tile(bs, d_pad, h_pad, k_pad, budget_bytes=24 * 1024 * 1024):
    cap = _round_up(bs, SUBLANE)
    for tb in (256, 128, 64, 32, 16, 8):
        if tb <= cap and _vmem_bytes_pass1(tb, d_pad, h_pad, k_pad) <= budget_bytes:
            return tb
    return SUBLANE


def clusternet_forward(x, params, alpha=1.0, matmul_dtype=jnp.float32):
    """Equivalent of ClusterNet.forward (EUC similarity): returns (z, x_reconstr, Q, P)."""
    bs, d_in = x.shape
    w_enc, b_enc = params["w_enc"], params["b_enc"]
    w_dec, b_dec = params["w_dec"], params["b_dec"]
    centroids = params["centroids"]
    n_hidden = w_enc.shape[1]
    n_clusters = centroids.shape[0]

    d_pad = _round_up(d_in, LANE)
    h_pad = _round_up(n_hidden, LANE)
    k_pad = _round_up(n_clusters, LANE)

    tb = _pick_batch_tile(bs, d_pad, h_pad, k_pad)
    b_pad = _round_up(bs, tb)
    n_btiles = b_pad // tb

    f32 = jnp.float32
    # --- layout plumbing: zero-pad everything to lane-dense shapes (wrapper side) ---
    x_p = jnp.zeros((b_pad, d_pad), f32).at[:bs, :d_in].set(x.astype(f32))
    we_p = jnp.zeros((d_pad, h_pad), f32).at[:d_in, :n_hidden].set(w_enc)
    be_p = jnp.zeros((1, h_pad), f32).at[:, :n_hidden].set(b_enc.reshape(1, -1))
    wd_p = jnp.zeros((h_pad, d_pad), f32).at[:n_hidden, :d_in].set(w_dec)
    bd_p = jnp.zeros((1, d_pad), f32).at[:, :d_in].set(b_dec.reshape(1, -1))
    ct_p = jnp.zeros((h_pad, k_pad), f32).at[:n_hidden, :n_clusters].set(centroids.T)
    # ||c||^2 precomputed once (parameter preprocessing, not per-step rescaling);
    # padded cluster columns get a huge distance so Q/P vanish there.
    c2_p = jnp.full((1, k_pad), _PAD_DIST2, f32).at[:, :n_clusters].set(
        jnp.sum(centroids * centroids, axis=1)[None, :])

    flops1 = (2 * b_pad * d_pad * h_pad + 2 * b_pad * h_pad * d_pad
              + 2 * b_pad * h_pad * k_pad + 4 * b_pad * h_pad + 12 * b_pad * k_pad)
    trans1 = b_pad * h_pad + 3 * b_pad * k_pad
    bytes1 = 4 * (b_pad * d_pad + d_pad * h_pad + h_pad + h_pad * d_pad + d_pad
                  + h_pad * k_pad + k_pad
                  + b_pad * h_pad + b_pad * d_pad + b_pad * k_pad
                  + n_btiles * SUBLANE * k_pad)

    kern1 = functools.partial(_tae_cluster_kernel, alpha=float(alpha), batch=bs,
                              tile_b=tb, matmul_dtype=matmul_dtype)
    z_p, xr_p, q_p, qcs_p = pl.pallas_call(
        kern1,
        grid=(n_btiles,),
        in_specs=[
            # NOTE: if the per-tile DMA of x shows up exposed in a profile at production
            # sizes, raise depth with pipeline_mode=pl.Buffered(3) here (costs 1 extra tile).
            pl.BlockSpec((tb, d_pad), lambda i: (i, 0)),
            pl.BlockSpec((d_pad, h_pad), lambda i: (0, 0)),   # resident weights
            pl.BlockSpec((1, h_pad), lambda i: (0, 0)),
            pl.BlockSpec((h_pad, d_pad), lambda i: (0, 0)),
            pl.BlockSpec((1, d_pad), lambda i: (0, 0)),
            pl.BlockSpec((h_pad, k_pad), lambda i: (0, 0)),
            pl.BlockSpec((1, k_pad), lambda i: (0, 0)),
        ],
        out_specs=(
            pl.BlockSpec((tb, h_pad), lambda i: (i, 0)),
            pl.BlockSpec((tb, d_pad), lambda i: (i, 0)),
            pl.BlockSpec((tb, k_pad), lambda i: (i, 0)),
            pl.BlockSpec((SUBLANE, k_pad), lambda i: (i, 0)),
        ),
        out_shape=(
            jax.ShapeDtypeStruct((b_pad, h_pad), f32),
            jax.ShapeDtypeStruct((b_pad, d_pad), f32),
            jax.ShapeDtypeStruct((b_pad, k_pad), f32),
            jax.ShapeDtypeStruct((n_btiles * SUBLANE, k_pad), f32),
        ),
        compiler_params=pltpu.CompilerParams(
            dimension_semantics=("parallel",),        # shards over v7x's 2 TCs
            vmem_limit_bytes=VMEM_LIMIT),
        cost_estimate=pl.CostEstimate(flops=flops1, transcendentals=trans1,
                                      bytes_accessed=bytes1),
    )(x_p, we_p, be_p, wd_p, bd_p, ct_p, c2_p)

    flops2 = 6 * b_pad * k_pad
    trans2 = 2 * b_pad * k_pad
    bytes2 = 4 * (2 * b_pad * k_pad + n_btiles * SUBLANE * k_pad)
    p_p = pl.pallas_call(
        _p_kernel,
        grid=(n_btiles,),
        in_specs=[
            pl.BlockSpec((tb, k_pad), lambda i: (i, 0)),
            pl.BlockSpec((n_btiles * SUBLANE, k_pad), lambda i: (0, 0)),  # all partials resident
        ],
        out_specs=pl.BlockSpec((tb, k_pad), lambda i: (i, 0)),
        out_shape=jax.ShapeDtypeStruct((b_pad, k_pad), f32),
        compiler_params=pltpu.CompilerParams(
            dimension_semantics=("parallel",),
            vmem_limit_bytes=VMEM_LIMIT),
        cost_estimate=pl.CostEstimate(flops=flops2, transcendentals=trans2,
                                      bytes_accessed=bytes2),
    )(q_p, qcs_p)

    # Slice off batch / lane padding (cheap XLA slices).
    return (z_p[:bs, :n_hidden], xr_p[:bs, :d_in],
            q_p[:bs, :n_clusters], p_p[:bs, :n_clusters])


# ----------------------------------------------------------------------------
# Main
# ----------------------------------------------------------------------------
if __name__ == "__main__":
    batch = 20          # not a multiple of the tile -> exercises batch padding + grid
    input_size = 16
    n_hidden = 32       # centr_size == tae.n_hidden
    n_clusters = 4
    alpha = 1.0         # run_config.cnet_alpha

    key = jax.random.PRNGKey(0)
    k_x, k_we, k_be, k_wd, k_bd, k_c = jax.random.split(key, 6)

    x = jax.random.normal(k_x, (batch, input_size), dtype=jnp.float32)
    params = {
        "w_enc": 0.1 * jax.random.normal(k_we, (input_size, n_hidden), jnp.float32),
        "b_enc": 0.1 * jax.random.normal(k_be, (1, n_hidden), jnp.float32),
        "w_dec": 0.1 * jax.random.normal(k_wd, (n_hidden, input_size), jnp.float32),
        "b_dec": 0.1 * jax.random.normal(k_bd, (1, input_size), jnp.float32),
        "centroids": jax.random.normal(k_c, (n_clusters, n_hidden), jnp.float32),
    }

    z, x_reconstr, Q, P = clusternet_forward(x, params, alpha=alpha)
    jax.block_until_ready((z, x_reconstr, Q, P))

    assert z.shape == (batch, n_hidden)
    assert x_reconstr.shape == (batch, input_size)
    assert Q.shape == (batch, n_clusters)
    assert P.shape == (batch, n_clusters)

    # Pure-JAX reference mirroring the PyTorch forward (incl. nansum semantics).
    z_ref = jnp.tanh(x @ params["w_enc"] + params["b_enc"])
    xr_ref = z_ref @ params["w_dec"] + params["b_dec"]
    diff = z_ref[:, None, :] - params["centroids"][None, :, :]
    sim_ref = jnp.sqrt(jnp.sum(diff * diff, axis=2))
    Q_ref = jnp.power(1.0 + sim_ref / alpha, -(alpha + 1.0) / 2.0)
    Q_ref = Q_ref / jnp.sum(jnp.where(jnp.isnan(Q_ref), 0.0, Q_ref),
                            axis=1, keepdims=True)
    P_ref = (Q_ref * Q_ref) / jnp.sum(Q_ref, axis=0, keepdims=True)
    P_ref = P_ref / jnp.sum(jnp.where(jnp.isnan(P_ref), 0.0, P_ref),
                            axis=1, keepdims=True)

    assert bool(jnp.allclose(z, z_ref, rtol=1e-2, atol=1e-4))
    assert bool(jnp.allclose(x_reconstr, xr_ref, rtol=1e-2, atol=1e-4))
    assert bool(jnp.allclose(Q, Q_ref, rtol=2e-2, atol=1e-3))
    assert bool(jnp.allclose(P, P_ref, rtol=2e-2, atol=1e-3))

    print("KERNEL_OK")
</pallas_src>

<mosaic_0001>
module attributes {stable_mosaic.version = 11 : i64} {
  func.func @_tae_cluster_kernel(%arg0: i32, %arg1: memref<16x128xf32, #tpu.memory_space<vmem>>, %arg2: memref<128x128xf32, #tpu.memory_space<vmem>>, %arg3: memref<1x128xf32, #tpu.memory_space<vmem>>, %arg4: memref<128x128xf32, #tpu.memory_space<vmem>>, %arg5: memref<1x128xf32, #tpu.memory_space<vmem>>, %arg6: memref<128x128xf32, #tpu.memory_space<vmem>>, %arg7: memref<1x128xf32, #tpu.memory_space<vmem>>, %arg8: memref<16x128xf32, #tpu.memory_space<vmem>>, %arg9: memref<16x128xf32, #tpu.memory_space<vmem>>, %arg10: memref<16x128xf32, #tpu.memory_space<vmem>>, %arg11: memref<8x128xf32, #tpu.memory_space<vmem>>) attributes {dimension_semantics = [#tpu.dimension_semantics<parallel>], iteration_bounds = array<i64: 2>, scalar_prefetch = 0 : i64, scratch_operands = 0 : i64, tpu.core_type = #tpu.core_type<tc>, window_params = [{transform_indices = @transform_0, window_bounds = array<i64: 16, 128>}, {pipeline_mode = #tpu.pipeline_mode<synchronous>, transform_indices = @transform_1, window_bounds = array<i64: 128, 128>}, {pipeline_mode = #tpu.pipeline_mode<synchronous>, transform_indices = @transform_2, window_bounds = array<i64: 1, 128>}, {pipeline_mode = #tpu.pipeline_mode<synchronous>, transform_indices = @transform_3, window_bounds = array<i64: 128, 128>}, {pipeline_mode = #tpu.pipeline_mode<synchronous>, transform_indices = @transform_4, window_bounds = array<i64: 1, 128>}, {pipeline_mode = #tpu.pipeline_mode<synchronous>, transform_indices = @transform_5, window_bounds = array<i64: 128, 128>}, {pipeline_mode = #tpu.pipeline_mode<synchronous>, transform_indices = @transform_6, window_bounds = array<i64: 1, 128>}, {transform_indices = @transform_7, window_bounds = array<i64: 16, 128>}, {transform_indices = @transform_8, window_bounds = array<i64: 16, 128>}, {transform_indices = @transform_9, window_bounds = array<i64: 16, 128>}, {transform_indices = @transform_10, window_bounds = array<i64: 8, 128>}]} {
    %c0 = arith.constant 0 : index
    %c0_0 = arith.constant 0 : index
    %0 = vector.load %arg1[%c0, %c0_0] : memref<16x128xf32, #tpu.memory_space<vmem>>, vector<16x128xf32>
    %c0_1 = arith.constant 0 : index
    %c0_2 = arith.constant 0 : index
    %1 = vector.load %arg2[%c0_1, %c0_2] : memref<128x128xf32, #tpu.memory_space<vmem>>, vector<128x128xf32>
    %c0_3 = arith.constant 0 : index
    %c0_4 = arith.constant 0 : index
    %2 = vector.load %arg3[%c0_3, %c0_4] : memref<1x128xf32, #tpu.memory_space<vmem>>, vector<1x128xf32>
    %c0_5 = arith.constant 0 : index
    %c0_6 = arith.constant 0 : index
    %3 = vector.load %arg4[%c0_5, %c0_6] : memref<128x128xf32, #tpu.memory_space<vmem>>, vector<128x128xf32>
    %c0_7 = arith.constant 0 : index
    %c0_8 = arith.constant 0 : index
    %4 = vector.load %arg5[%c0_7, %c0_8] : memref<1x128xf32, #tpu.memory_space<vmem>>, vector<1x128xf32>
    %c0_9 = arith.constant 0 : index
    %c0_10 = arith.constant 0 : index
    %5 = vector.load %arg6[%c0_9, %c0_10] : memref<128x128xf32, #tpu.memory_space<vmem>>, vector<128x128xf32>
    %cst = arith.constant dense<0.000000e+00> : vector<16x128xf32>
    %6 = tpu.matmul %0, %1, %cst {dimension_numbers = #tpu.dot_dimension_numbers<[1], [0], [0], [1], [0, 0, 1, 1], [], []>} : vector<16x128xf32>, vector<128x128xf32>, vector<16x128xf32> -> vector<16x128xf32>
    %7 = vector.broadcast %2 : vector<1x128xf32> to vector<16x128xf32>
    %8 = arith.addf %6, %7 : vector<16x128xf32>
    %9 = math.tanh %8 : vector<16x128xf32>
    %c0_11 = arith.constant 0 : index
    %c0_12 = arith.constant 0 : index
    %10 = vector.load %arg8[%c0_11, %c0_12] : memref<16x128xf32, #tpu.memory_space<vmem>>, vector<16x128xf32>
    tpu.vector_store %arg8[%c0_11, %c0_12], %9 {strides = array<i32>} : memref<16x128xf32, #tpu.memory_space<vmem>>, vector<16x128xf32>,
    %cst_13 = arith.constant dense<0.000000e+00> : vector<16x128xf32>
    %11 = tpu.matmul %9, %3, %cst_13 {dimension_numbers = #tpu.dot_dimension_numbers<[1], [0], [0], [1], [0, 0, 1, 1], [], []>} : vector<16x128xf32>, vector<128x128xf32>, vector<16x128xf32> -> vector<16x128xf32>
    %12 = vector.broadcast %4 : vector<1x128xf32> to vector<16x128xf32>
    %13 = arith.addf %11, %12 : vector<16x128xf32>
    %c0_14 = arith.constant 0 : index
    %c0_15 = arith.constant 0 : index
    %14 = vector.load %arg9[%c0_14, %c0_15] : memref<16x128xf32, #tpu.memory_space<vmem>>, vector<16x128xf32>
    tpu.vector_store %arg9[%c0_14, %c0_15], %13 {strides = array<i32>} : memref<16x128xf32, #tpu.memory_space<vmem>>, vector<16x128xf32>,
    %15 = arith.mulf %9, %9 : vector<16x128xf32>
    %cst_16 = arith.constant dense<0.000000e+00> : vector<16xf32>
    %16 = vector.multi_reduction <add>, %15, %cst_16 [1] : vector<16x128xf32> to vector<16xf32>
    %17 = vector.shape_cast %16 : vector<16xf32> to vector<16x1xf32>
    %cst_17 = arith.constant dense<0.000000e+00> : vector<16x128xf32>
    %18 = tpu.matmul %9, %5, %cst_17 {dimension_numbers = #tpu.dot_dimension_numbers<[1], [0], [0], [1], [0, 0, 1, 1], [], []>} : vector<16x128xf32>, vector<128x128xf32>, vector<16x128xf32> -> vector<16x128xf32>
    %c0_18 = arith.constant 0 : index
    %c0_19 = arith.constant 0 : index
    %19 = vector.load %arg7[%c0_18, %c0_19] : memref<1x128xf32, #tpu.memory_space<vmem>>, vector<1x128xf32>
    %20 = vector.broadcast %17 : vector<16x1xf32> to vector<16x128xf32>
    %21 = vector.broadcast %19 : vector<1x128xf32> to vector<16x128xf32>
    %22 = arith.addf %20, %21 : vector<16x128xf32>
    %cst_20 = arith.constant 2.000000e+00 : f32
    %23 = vector.broadcast %cst_20 : f32 to vector<16x128xf32>
    %24 = arith.mulf %23, %18 : vector<16x128xf32>
    %25 = arith.subf %22, %24 : vector<16x128xf32>
    %cst_21 = arith.constant 0.000000e+00 : f32
    %26 = vector.broadcast %cst_21 : f32 to vector<16x128xf32>
    %27 = arith.maximumf %25, %26 : vector<16x128xf32>
    %28 = math.sqrt %27 : vector<16x128xf32>
    %cst_22 = arith.constant 1.000000e+00 : f32
    %29 = vector.broadcast %cst_22 : f32 to vector<16x128xf32>
    %30 = arith.addf %29, %28 : vector<16x128xf32>
    %31 = tpu.reciprocal %30 {approx = true} : vector<16x128xf32> -> vector<16x128xf32>
    %32 = arith.cmpf one, %31, %31 : vector<16x128xf32>
    %cst_23 = arith.constant 0.000000e+00 : f32
    %33 = vector.broadcast %cst_23 : f32 to vector<16x128xf32>
    %34 = arith.select %32, %33, %31 : vector<16x128xi1>, vector<16x128xf32>
    %cst_24 = arith.constant dense<0.000000e+00> : vector<16xf32>
    %35 = vector.multi_reduction <add>, %34, %cst_24 [1] : vector<16x128xf32> to vector<16xf32>
    %36 = vector.shape_cast %35 : vector<16xf32> to vector<16x1xf32>
    %37 = tpu.reciprocal %36 {approx = true} : vector<16x1xf32> -> vector<16x1xf32>
    %38 = vector.broadcast %37 : vector<16x1xf32> to vector<16x128xf32>
    %39 = arith.mulf %31, %38 : vector<16x128xf32>
    %c0_25 = arith.constant 0 : index
    %c0_26 = arith.constant 0 : index
    %40 = vector.load %arg10[%c0_25, %c0_26] : memref<16x128xf32, #tpu.memory_space<vmem>>, vector<16x128xf32>
    tpu.vector_store %arg10[%c0_25, %c0_26], %39 {strides = array<i32>} : memref<16x128xf32, #tpu.memory_space<vmem>>, vector<16x128xf32>,
    %41 = tpu.iota {dimensions = array<i32: 0>} : vector<16x128xi32>
    %c16_i32 = arith.constant 16 : i32
    %42 = arith.muli %arg0, %c16_i32 : i32
    %43 = vector.broadcast %42 : i32 to vector<16x128xi32>
    %44 = arith.addi %41, %43 : vector<16x128xi32>
    %c20_i32 = arith.constant 20 : i32
    %45 = vector.broadcast %c20_i32 : i32 to vector<16x128xi32>
    %46 = arith.cmpi slt, %44, %45 : vector<16x128xi32>
    %cst_27 = arith.constant 0.000000e+00 : f32
    %47 = vector.broadcast %cst_27 : f32 to vector<16x128xf32>
    %48 = arith.select %46, %39, %47 : vector<16x128xi1>, vector<16x128xf32>
    %cst_28 = arith.constant dense<0.000000e+00> : vector<128xf32>
    %49 = vector.multi_reduction <add>, %48, %cst_28 [0] : vector<16x128xf32> to vector<128xf32>
    %50 = vector.shape_cast %49 : vector<128xf32> to vector<1x128xf32>
    %51 = tpu.iota {dimensions = array<i32: 0>} : vector<8x128xi32>
    %c0_i32 = arith.constant 0 : i32
    %52 = vector.broadcast %c0_i32 : i32 to vector<8x128xi32>
    %53 = arith.cmpi eq, %51, %52 : vector<8x128xi32>
    %54 = vector.shape_cast %50 : vector<1x128xf32> to vector<1x128xf32>
    %55 = vector.broadcast %54 : vector<1x128xf32> to vector<8x128xf32>
    %cst_29 = arith.constant 0.000000e+00 : f32
    %56 = vector.broadcast %cst_29 : f32 to vector<8x128xf32>
    %57 = arith.select %53, %55, %56 : vector<8x128xi1>, vector<8x128xf32>
    %c0_30 = arith.constant 0 : index
    %c0_31 = arith.constant 0 : index
    %58 = vector.load %arg11[%c0_30, %c0_31] : memref<8x128xf32, #tpu.memory_space<vmem>>, vector<8x128xf32>
    tpu.vector_store %arg11[%c0_30, %c0_31], %57 {strides = array<i32>} : memref<8x128xf32, #tpu.memory_space<vmem>>, vector<8x128xf32>,
    return
  }
  func.func @transform_0(%arg0: i32) -> (i32, i32) {
    %c0_i32 = arith.constant 0 : i32
    %c0_i32_0 = arith.constant 0 : i32
    return %arg0, %c0_i32 : i32, i32
  }
  func.func @transform_1(%arg0: i32) -> (i32, i32) {
    %c0_i32 = arith.constant 0 : i32
    %c0_i32_0 = arith.constant 0 : i32
    %c0_i32_1 = arith.constant 0 : i32
    return %c0_i32, %c0_i32_0 : i32, i32
  }
  func.func @transform_2(%arg0: i32) -> (i32, i32) {
    %c0_i32 = arith.constant 0 : i32
    %c0_i32_0 = arith.constant 0 : i32
    %c0_i32_1 = arith.constant 0 : i32
    return %c0_i32, %c0_i32_0 : i32, i32
  }
  func.func @transform_3(%arg0: i32) -> (i32, i32) {
    %c0_i32 = arith.constant 0 : i32
    %c0_i32_0 = arith.constant 0 : i32
    %c0_i32_1 = arith.constant 0 : i32
    return %c0_i32, %c0_i32_0 : i32, i32
  }
  func.func @transform_4(%arg0: i32) -> (i32, i32) {
    %c0_i32 = arith.constant 0 : i32
    %c0_i32_0 = arith.constant 0 : i32
    %c0_i32_1 = arith.constant 0 : i32
    return %c0_i32, %c0_i32_0 : i32, i32
  }
  func.func @transform_5(%arg0: i32) -> (i32, i32) {
    %c0_i32 = arith.constant 0 : i32
    %c0_i32_0 = arith.constant 0 : i32
    %c0_i32_1 = arith.constant 0 : i32
    return %c0_i32, %c0_i32_0 : i32, i32
  }
  func.func @transform_6(%arg0: i32) -> (i32, i32) {
    %c0_i32 = arith.constant 0 : i32
    %c0_i32_0 = arith.constant 0 : i32
    %c0_i32_1 = arith.constant 0 : i32
    return %c0_i32, %c0_i32_0 : i32, i32
  }
  func.func @transform_7(%arg0: i32) -> (i32, i32) {
    %c0_i32 = arith.constant 0 : i32
    %c0_i32_0 = arith.constant 0 : i32
    return %arg0, %c0_i32 : i32, i32
  }
  func.func @transform_8(%arg0: i32) -> (i32, i32) {
    %c0_i32 = arith.constant 0 : i32
    %c0_i32_0 = arith.constant 0 : i32
    return %arg0, %c0_i32 : i32, i32
  }
  func.func @transform_9(%arg0: i32) -> (i32, i32) {
    %c0_i32 = arith.constant 0 : i32
    %c0_i32_0 = arith.constant 0 : i32
    return %arg0, %c0_i32 : i32, i32
  }
  func.func @transform_10(%arg0: i32) -> (i32, i32) {
    %c0_i32 = arith.constant 0 : i32
    %c0_i32_0 = arith.constant 0 : i32
    return %arg0, %c0_i32 : i32, i32
  }
}

</mosaic_0001>

<llo_original>
// kernel: tpu_custom_call.1
$region0: #{tpu_custom_call.1}
  #allocation0 [shape = 'u32[]', space=smem, size = 0x4, offset = 0x4, fixed_abs, tag = 'smem constant byte address 0x4 - core index']
  #allocation1 [shape = 'u32[144,128]{1,0:T(1,128)}', space=vmem, size = 0x12000, scoped, tag = 'internal scratch']
  %s0 = inlined_call_operand.hbm [shape: f32[32,128], index: 0, kind: input, shape index: {}]
  %s1 = inlined_call_operand.hbm [shape: f32[128,128], index: 1, kind: input, shape index: {}]
  %s2 = inlined_call_operand.vmem [shape: f32[1,128], index: 2, kind: input, shape index: {}]
  %s3 = inlined_call_operand.hbm [shape: f32[128,128], index: 3, kind: input, shape index: {}]
  %s4 = inlined_call_operand.vmem [shape: f32[1,128], index: 4, kind: input, shape index: {}]
  %s5 = inlined_call_operand.hbm [shape: f32[128,128], index: 5, kind: input, shape index: {}]
  %s6 = inlined_call_operand.vmem [shape: f32[1,128], index: 6, kind: input, shape index: {}]
  %s7 = inlined_call_operand.hbm [shape: f32[32,128], index: 7, kind: output, shape index: {0}]
  %s8 = inlined_call_operand.hbm [shape: f32[32,128], index: 8, kind: output, shape index: {1}]
  %s9 = inlined_call_operand.hbm [shape: f32[32,128], index: 9, kind: output, shape index: {2}]
  %s10 = inlined_call_operand.hbm [shape: f32[16,128], index: 10, kind: output, shape index: {3}]
  %11 = xla_tuple %s7, %s8, %s9, %s10
  %s12 = sld [smem:[#allocation0]]
  $region101: #{tpu_custom_call.1} parent=0
    _
  %s14 = ssub.s32 1, %s12
  %s15 = scalar_select 0, %s14, %s12
  $region1: #{tpu_custom_call.1} parent=0
    #allocation2 [shape = 'u8[16384]{0}', space=vmem, size = 0x4000, scoped, tag = 'input window, operand 0']
    #allocation3 [shape = 's32[2]{0}', space=sflag, size = 0x8, scoped, tag = 'scoped memory for tpu_custom_call.1']
    #allocation4 [shape = 's32[2]{0}', space=sflag, size = 0x8, scoped, tag = 'scoped memory for tpu_custom_call.1']
    #allocation5 [shape = 'u8[65536]{0}', space=vmem, size = 0x10000, scoped, tag = 'input window, operand 1, single buffered']
    #allocation6 [shape = 's32[1]{0}', space=sflag, size = 0x4, scoped, tag = 'scoped memory for tpu_custom_call.1']
    #allocation7 [shape = 'u8[65536]{0}', space=vmem, size = 0x10000, scoped, tag = 'input window, operand 3, single buffered']
    #allocation8 [shape = 'u8[65536]{0}', space=vmem, size = 0x10000, scoped, tag = 'input window, operand 5, single buffered']
    #allocation9 [shape = 's32[1]{0}', space=sflag, size = 0x4, scoped, tag = 'scoped memory for tpu_custom_call.1']
    #allocation10 [shape = 'u8[16384]{0}', space=vmem, size = 0x4000, scoped, tag = 'output window, operand 0']
    #allocation11 [shape = 'u8[16384]{0}', space=vmem, size = 0x4000, scoped, tag = 'output window, operand 1']
    #allocation12 [shape = 's32[2]{0}', space=sflag, size = 0x8, scoped, tag = 'scoped memory for tpu_custom_call.1']
    #allocation13 [shape = 'u8[16384]{0}', space=vmem, size = 0x4000, scoped, tag = 'output window, operand 2']
    #allocation14 [shape = 'u8[8192]{0}', space=vmem, size = 0x2000, scoped, tag = 'output window, operand 3']
    #allocation15 [shape = 's32[2]{0}', space=sflag, size = 0x8, scoped, tag = 'scoped memory for tpu_custom_call.1']
    %16 = vsyncpa [#allocation3], 0
    %s17 = scalar_lea.sflag [#allocation3], 1
    %18 = vsyncpa %s17, 0
    %19 = vsyncpa [#allocation6], 0
    %20 = vsyncpa [#allocation9], 0
    %21 = vsyncpa [#allocation4], 0
    %s22 = scalar_lea.sflag [#allocation4], 1
    %23 = vsyncpa %s22, 0
    %24 = vsyncpa [#allocation12], 0
    %s25 = scalar_lea.sflag [#allocation12], 1
    %26 = vsyncpa %s25, 0
    %27 = vsyncpa [#allocation15], 0
    %s28 = scalar_lea.sflag [#allocation15], 1
    %29 = vsyncpa %s28, 0
    loop: start=0, step=1, limit=4
    $region2: #{tpu_custom_call.1} parent=1 // loop_pre_header
      _
    $region3: #{tpu_custom_call.1} parent=1 // loop_header
      %s31 = sphi 0, %s35
      %p32 = scmp.ge.s32.totalorder %s31, 4
      %s41 = sphi 0, %s43
      %s44 = sphi 0, %s41
      %s45 = sphi 0, %s44
      %s61 = sphi 0, %s45
      %s65 = sphi 0, %s65
      %s67 = sphi 0, %s65
      %s68 = sphi 0, %s67
      %s82 = sphi 0, %s68
      %s86 = sphi 0, %s86
      %s88 = sphi 0, %s86
      %s89 = sphi 0, %s88
      %s103 = sphi 0, %s89
      %s107 = sphi 0, %s107
      %s109 = sphi 0, %s107
      %s110 = sphi 0, %s109
      %s124 = sphi 0, %s110
      %s128 = sphi 0, %s128
      %s130 = sphi 0, %s128
      %s131 = sphi 0, %s130
      %s145 = sphi 0, %s131
      %s149 = sphi 0, %s149
      %s151 = sphi 0, %s149
      %s152 = sphi 0, %s151
      %s166 = sphi 0, %s152
      %s170 = sphi 0, %s170
      %s172 = sphi 0, %s170
      %s173 = sphi 0, %s172
      %s187 = sphi 0, %s173
      %s193 = sphi 0, %s195
      %s196 = sphi 0, %s193
      %s197 = sphi 0, %s196
      %s213 = sphi 0, %s197
      %s219 = sphi 0, %s221
      %s222 = sphi 0, %s219
      %s223 = sphi 0, %s222
      %s239 = sphi 0, %s223
      %s245 = sphi 0, %s247
      %s248 = sphi 0, %s245
      %s249 = sphi 0, %s248
      %s265 = sphi 0, %s249
      %s271 = sphi 0, %s273
      %s274 = sphi 0, %s271
      %s275 = sphi 0, %s274
      %s291 = sphi 0, %s275
    $region4: #{tpu_custom_call.1} parent=1 // loop_header_branch
      %34 = sbr.rel (%p32) target = $region8
    $region5: #{tpu_custom_call.1} parent=1 // loop_body
      %s36 = ssub.s32 %s31, 1
      %s37 = ssub.s32 %s31, 2
      %s38 = sadd.s32 %s31, 1
      %s39 = ssub.s32 %s31, %s38
      %p40 = scmp.eq.s32.totalorder %s39, 0
      %s42 = sadd.s32 %s41, 1
      %s43 = scalar_select %p40, %s41, %s42
      %p46 = pneg %p40
      %p47 = scmp.eq.s32.totalorder %s31, 1
      %p48 = por %p46, %p47
      %p49 = scmp.ne.s32.totalorder %s41, %s44
      %p50 = scmp.eq.s32.totalorder %s31, 0
      %p51 = por %p49, %p50
      %p52 = scmp.ne.s32.totalorder %s41, %s44
      %p53 = scmp.eq.s32.totalorder %s36, 1
      %p54 = por %p52, %p53
      %p55 = scmp.ne.s32.totalorder %s44, %s45
      %p56 = scmp.eq.s32.totalorder %s36, 0
      %p57 = por %p55, %p56
      %p58 = scmp.ne.s32.totalorder %s44, %s45
      %p59 = scmp.eq.s32.totalorder %s37, 1
      %p60 = por %p58, %p59
      %p62 = scmp.ne.s32.totalorder %s45, %s61
      %p63 = scmp.eq.s32.totalorder %s37, 0
      %p64 = por %p62, %p63
      %s66 = sadd.s32 %s65, 1
      %p69 = scmp.eq.s32.totalorder %s31, 1
      %p70 = scmp.ne.s32.totalorder %s65, %s67
      %p71 = scmp.eq.s32.totalorder %s31, 0
      %p72 = por %p70, %p71
      %p73 = scmp.ne.s32.totalorder %s65, %s67
      %p74 = scmp.eq.s32.totalorder %s36, 1
      %p75 = por %p73, %p74
      %p76 = scmp.ne.s32.totalorder %s67, %s68
      %p77 = scmp.eq.s32.totalorder %s36, 0
      %p78 = por %p76, %p77
      %p79 = scmp.ne.s32.totalorder %s67, %s68
      %p80 = scmp.eq.s32.totalorder %s37, 1
      %p81 = por %p79, %p80
      %p83 = scmp.ne.s32.totalorder %s68, %s82
      %p84 = scmp.eq.s32.totalorder %s37, 0
      %p85 = por %p83, %p84
      %s87 = sadd.s32 %s86, 1
      %p90 = scmp.eq.s32.totalorder %s31, 1
      %p91 = scmp.ne.s32.totalorder %s86, %s88
      %p92 = scmp.eq.s32.totalorder %s31, 0
      %p93 = por %p91, %p92
      %p94 = scmp.ne.s32.totalorder %s86, %s88
      %p95 = scmp.eq.s32.totalorder %s36, 1
      %p96 = por %p94, %p95
      %p97 = scmp.ne.s32.totalorder %s88, %s89
      %p98 = scmp.eq.s32.totalorder %s36, 0
      %p99 = por %p97, %p98
      %p100 = scmp.ne.s32.totalorder %s88, %s89
      %p101 = scmp.eq.s32.totalorder %s37, 1
      %p102 = por %p100, %p101
      %p104 = scmp.ne.s32.totalorder %s89, %s103
      %p105 = scmp.eq.s32.totalorder %s37, 0
      %p106 = por %p104, %p105
      %s108 = sadd.s32 %s107, 1
      %p111 = scmp.eq.s32.totalorder %s31, 1
      %p112 = scmp.ne.s32.totalorder %s107, %s109
      %p113 = scmp.eq.s32.totalorder %s31, 0
      %p114 = por %p112, %p113
      %p115 = scmp.ne.s32.totalorder %s107, %s109
      %p116 = scmp.eq.s32.totalorder %s36, 1
      %p117 = por %p115, %p116
      %p118 = scmp.ne.s32.totalorder %s109, %s110
      %p119 = scmp.eq.s32.totalorder %s36, 0
      %p120 = por %p118, %p119
      %p121 = scmp.ne.s32.totalorder %s109, %s110
      %p122 = scmp.eq.s32.totalorder %s37, 1
      %p123 = por %p121, %p122
      %p125 = scmp.ne.s32.totalorder %s110, %s124
      %p126 = scmp.eq.s32.totalorder %s37, 0
      %p127 = por %p125, %p126
      %s129 = sadd.s32 %s128, 1
      %p132 = scmp.eq.s32.totalorder %s31, 1
      %p133 = scmp.ne.s32.totalorder %s128, %s130
      %p134 = scmp.eq.s32.totalorder %s31, 0
      %p135 = por %p133, %p134
      %p136 = scmp.ne.s32.totalorder %s128, %s130
      %p137 = scmp.eq.s32.totalorder %s36, 1
      %p138 = por %p136, %p137
      %p139 = scmp.ne.s32.totalorder %s130, %s131
      %p140 = scmp.eq.s32.totalorder %s36, 0
      %p141 = por %p139, %p140
      %p142 = scmp.ne.s32.totalorder %s130, %s131
      %p143 = scmp.eq.s32.totalorder %s37, 1
      %p144 = por %p142, %p143
      %p146 = scmp.ne.s32.totalorder %s131, %s145
      %p147 = scmp.eq.s32.totalorder %s37, 0
      %p148 = por %p146, %p147
      %s150 = sadd.s32 %s149, 1
      %p153 = scmp.eq.s32.totalorder %s31, 1
      %p154 = scmp.ne.s32.totalorder %s149, %s151
      %p155 = scmp.eq.s32.totalorder %s31, 0
      %p156 = por %p154, %p155
      %p157 = scmp.ne.s32.totalorder %s149, %s151
      %p158 = scmp.eq.s32.totalorder %s36, 1
      %p159 = por %p157, %p158
      %p160 = scmp.ne.s32.totalorder %s151, %s152
      %p161 = scmp.eq.s32.totalorder %s36, 0
      %p162 = por %p160, %p161
      %p163 = scmp.ne.s32.totalorder %s151, %s152
      %p164 = scmp.eq.s32.totalorder %s37, 1
      %p165 = por %p163, %p164
      %p167 = scmp.ne.s32.totalorder %s152, %s166
      %p168 = scmp.eq.s32.totalorder %s37, 0
      %p169 = por %p167, %p168
      %s171 = sadd.s32 %s170, 1
      %p174 = scmp.eq.s32.totalorder %s31, 1
      %p175 = scmp.ne.s32.totalorder %s170, %s172
      %p176 = scmp.eq.s32.totalorder %s31, 0
      %p177 = por %p175, %p176
      %p178 = scmp.ne.s32.totalorder %s170, %s172
      %p179 = scmp.eq.s32.totalorder %s36, 1
      %p180 = por %p178, %p179
      %p181 = scmp.ne.s32.totalorder %s172, %s173
      %p182 = scmp.eq.s32.totalorder %s36, 0
      %p183 = por %p181, %p182
      %p184 = scmp.ne.s32.totalorder %s172, %s173
      %p185 = scmp.eq.s32.totalorder %s37, 1
      %p186 = por %p184, %p185
      %p188 = scmp.ne.s32.totalorder %s173, %s187
      %p189 = scmp.eq.s32.totalorder %s37, 0
      %p190 = por %p188, %p189
      %s191 = ssub.s32 %s31, %s38
      %p192 = scmp.eq.s32.totalorder %s191, 0
      %s194 = sadd.s32 %s193, 1
      %s195 = scalar_select %p192, %s193, %s194
      %p198 = pneg %p192
      %p199 = scmp.eq.s32.totalorder %s31, 1
      %p200 = por %p198, %p199
      %p201 = scmp.ne.s32.totalorder %s193, %s196
      %p202 = scmp.eq.s32.totalorder %s31, 0
      %p203 = por %p201, %p202
      %p204 = scmp.ne.s32.totalorder %s193, %s196
      %p205 = scmp.eq.s32.totalorder %s36, 1
      %p206 = por %p204, %p205
      %p207 = scmp.ne.s32.totalorder %s196, %s197
      %p208 = scmp.eq.s32.totalorder %s36, 0
      %p209 = por %p207, %p208
      %p210 = scmp.ne.s32.totalorder %s196, %s197
      %p211 = scmp.eq.s32.totalorder %s37, 1
      %p212 = por %p210, %p211
      %p214 = scmp.ne.s32.totalorder %s197, %s213
      %p215 = scmp.eq.s32.totalorder %s37, 0
      %p216 = por %p214, %p215
      %s217 = ssub.s32 %s31, %s38
      %p218 = scmp.eq.s32.totalorder %s217, 0
      %s220 = sadd.s32 %s219, 1
      %s221 = scalar_select %p218, %s219, %s220
      %p224 = pneg %p218
      %p225 = scmp.eq.s32.totalorder %s31, 1
      %p226 = por %p224, %p225
      %p227 = scmp.ne.s32.totalorder %s219, %s222
      %p228 = scmp.eq.s32.totalorder %s31, 0
      %p229 = por %p227, %p228
      %p230 = scmp.ne.s32.totalorder %s219, %s222
      %p231 = scmp.eq.s32.totalorder %s36, 1
      %p232 = por %p230, %p231
      %p233 = scmp.ne.s32.totalorder %s222, %s223
      %p234 = scmp.eq.s32.totalorder %s36, 0
      %p235 = por %p233, %p234
      %p236 = scmp.ne.s32.totalorder %s222, %s223
      %p237 = scmp.eq.s32.totalorder %s37, 1
      %p238 = por %p236, %p237
      %p240 = scmp.ne.s32.totalorder %s223, %s239
      %p241 = scmp.eq.s32.totalorder %s37, 0
      %p242 = por %p240, %p241
      %s243 = ssub.s32 %s31, %s38
      %p244 = scmp.eq.s32.totalorder %s243, 0
      %s246 = sadd.s32 %s245, 1
      %s247 = scalar_select %p244, %s245, %s246
      %p250 = pneg %p244
      %p251 = scmp.eq.s32.totalorder %s31, 1
      %p252 = por %p250, %p251
      %p253 = scmp.ne.s32.totalorder %s245, %s248
      %p254 = scmp.eq.s32.totalorder %s31, 0
      %p255 = por %p253, %p254
      %p256 = scmp.ne.s32.totalorder %s245, %s248
      %p257 = scmp.eq.s32.totalorder %s36, 1
      %p258 = por %p256, %p257
      %p259 = scmp.ne.s32.totalorder %s248, %s249
      %p260 = scmp.eq.s32.totalorder %s36, 0
      %p261 = por %p259, %p260
      %p262 = scmp.ne.s32.totalorder %s248, %s249
      %p263 = scmp.eq.s32.totalorder %s37, 1
      %p264 = por %p262, %p263
      %p266 = scmp.ne.s32.totalorder %s249, %s265
      %p267 = scmp.eq.s32.totalorder %s37, 0
      %p268 = por %p266, %p267
      %s269 = ssub.s32 %s31, %s38
      %p270 = scmp.eq.s32.totalorder %s269, 0
      %s272 = sadd.s32 %s271, 1
      %s273 = scalar_select %p270, %s271, %s272
      %p276 = pneg %p270
      %p277 = scmp.eq.s32.totalorder %s31, 1
      %p278 = por %p276, %p277
      %p279 = scmp.ne.s32.totalorder %s271, %s274
      %p280 = scmp.eq.s32.totalorder %s31, 0
      %p281 = por %p279, %p280
      %p282 = scmp.ne.s32.totalorder %s271, %s274
      %p283 = scmp.eq.s32.totalorder %s36, 1
      %p284 = por %p282, %p283
      %p285 = scmp.ne.s32.totalorder %s274, %s275
      %p286 = scmp.eq.s32.totalorder %s36, 0
      %p287 = por %p285, %p286
      %p288 = scmp.ne.s32.totalorder %s274, %s275
      %p289 = scmp.eq.s32.totalorder %s37, 1
      %p290 = por %p288, %p289
      %p292 = scmp.ne.s32.totalorder %s275, %s291
      %p293 = scmp.eq.s32.totalorder %s37, 0
      %p294 = por %p292, %p293
      %p295 = scmp.le.s32.totalorder 1, %s31
      %p296 = scmp.lt.s32.totalorder %s31, 3
      %p297 = pnand %p295, %p296
      %p298 = pneg %p297
      // Predicated region
      $region9: #{tpu_custom_call.1} parent=5 // pred_check
        _
      $region10: #{tpu_custom_call.1} parent=5 // pred_check_branch
        %300 = sbr.rel (%p297) target = $region12
      $region11: #{tpu_custom_call.1} parent=5 // pred_region
        %s301 = ssub.s32 %s31, 1
        // Predicated region
        $region13: #{tpu_custom_call.1} parent=11 // pred_check
          %p302 = pneg %p78
        $region14: #{tpu_custom_call.1} parent=11 // pred_check_branch
          %304 = sbr.rel (%p302) target = $region16
        $region15: #{tpu_custom_call.1} parent=11 // pred_region
          %s306 = ssub.s32 2048, 2048
          %307 = vsyncadd [#allocation6], %s306
          %s308 = sshll.u32 [#allocation5], 4
          %s309 = int_to_ptr.vmem [resolvable:$true] %s308
          %314 = dma.hbm_to_vmem [thread:$0]  %s1, 2048, %s309, [#allocation6], 128, 128, 8
        $region16: #{tpu_custom_call.1} parent=11 // pred_fallthru
          _
        // Predicated region
        $region17: #{tpu_custom_call.1} parent=11 // pred_check
          %p315 = pneg %p99
        $region18: #{tpu_custom_call.1} parent=11 // pred_check_branch
          %317 = sbr.rel (%p315) target = $region20
        $region19: #{tpu_custom_call.1} parent=11 // pred_region
          _
        $region20: #{tpu_custom_call.1} parent=11 // pred_fallthru
          _
        // Predicated region
        $region21: #{tpu_custom_call.1} parent=11 // pred_check
          %p318 = pneg %p120
        $region22: #{tpu_custom_call.1} parent=11 // pred_check_branch
          %320 = sbr.rel (%p318) target = $region24
        $region23: #{tpu_custom_call.1} parent=11 // pred_region
          %s322 = ssub.s32 2048, 2048
          %323 = vsyncadd [#allocation6], %s322
          %s324 = sshll.u32 [#allocation7], 4
          %s325 = int_to_ptr.vmem [resolvable:$true] %s324
          %330 = dma.hbm_to_vmem [thread:$0]  %s3, 2048, %s325, [#allocation6], 128, 128, 8
        $region24: #{tpu_custom_call.1} parent=11 // pred_fallthru
          _
        // Predicated region
        $region25: #{tpu_custom_call.1} parent=11 // pred_check
          %p331 = pneg %p141
        $region26: #{tpu_custom_call.1} parent=11 // pred_check_branch
          %333 = sbr.rel (%p331) target = $region28
        $region27: #{tpu_custom_call.1} parent=11 // pred_region
          _
        $region28: #{tpu_custom_call.1} parent=11 // pred_fallthru
          _
        // Predicated region
        $region29: #{tpu_custom_call.1} parent=11 // pred_check
          %p334 = pneg %p162
        $region30: #{tpu_custom_call.1} parent=11 // pred_check_branch
          %336 = sbr.rel (%p334) target = $region32
        $region31: #{tpu_custom_call.1} parent=11 // pred_region
          %s338 = ssub.s32 2048, 2048
          %339 = vsyncadd [#allocation9], %s338
          %s340 = sshll.u32 [#allocation8], 4
          %s341 = int_to_ptr.vmem [resolvable:$true] %s340
          %346 = dma.hbm_to_vmem [thread:$0]  %s5, 2048, %s341, [#allocation9], 128, 128, 8
        $region32: #{tpu_custom_call.1} parent=11 // pred_fallthru
          _
        // Predicated region
        $region33: #{tpu_custom_call.1} parent=11 // pred_check
          %p347 = pneg %p183
        $region34: #{tpu_custom_call.1} parent=11 // pred_check_branch
          %349 = sbr.rel (%p347) target = $region36
        $region35: #{tpu_custom_call.1} parent=11 // pred_region
          _
        $region36: #{tpu_custom_call.1} parent=11 // pred_fallthru
          _
      $region12: #{tpu_custom_call.1} parent=5 // pred_fallthru
        _
      %p350 = scmp.lt.s32.totalorder %s31, 2
      // Predicated region
      $region37: #{tpu_custom_call.1} parent=5 // pred_check
        %p351 = pneg %p350
      $region38: #{tpu_custom_call.1} parent=5 // pred_check_branch
        %353 = sbr.rel (%p351) target = $region40
      $region39: #{tpu_custom_call.1} parent=5 // pred_region
        // Predicated region
        $region41: #{tpu_custom_call.1} parent=39 // pred_check
          %p354 = pneg %p51
        $region42: #{tpu_custom_call.1} parent=39 // pred_check_branch
          %356 = sbr.rel (%p354) target = $region44
        $region43: #{tpu_custom_call.1} parent=39 // pred_region
          %s357 = sand.u32 %s41, 1
          %s358 = scalar_lea.sflag [#allocation3], %s357
          %s359 = sand.u32 %s41, 1
          %s360 = smul.addr %s359, 16
          %s361 = scalar_lea.vmem [#allocation2], %s360
          %s362 = smul.u32 2, %s31
          %s364 = ssub.s32 256, 256
          %365 = vsyncadd %s358, %s364
          %s366 = smul.addr %s362, 128
          %s367 = scalar_lea.hbm %s0, %s366
          %s368 = sshll.u32 %s361, 4
          %s369 = int_to_ptr.vmem [resolvable:$true] %s368
          %374 = dma.hbm_to_vmem [thread:$0]  %s367, 256, %s369, %s358, 128, 128, 8
        $region44: #{tpu_custom_call.1} parent=39 // pred_fallthru
          _
      $region40: #{tpu_custom_call.1} parent=5 // pred_fallthru
        _
      %p375 = scmp.le.s32.totalorder 1, %s31
      %p376 = scmp.lt.s32.totalorder %s31, 3
      %p377 = pnand %p375, %p376
      %p378 = pneg %p377
      // Predicated region
      $region45: #{tpu_custom_call.1} parent=5 // pred_check
        _
      $region46: #{tpu_custom_call.1} parent=5 // pred_check_branch
        %380 = sbr.rel (%p377) target = $region48
      $region47: #{tpu_custom_call.1} parent=5 // pred_region
        %s381 = ssub.s32 %s31, 1
        %s382 = sand.u32 %s44, 1
        %s383 = scalar_lea.sflag [#allocation3], %s382
        %s384 = sand.u32 %s44, 1
        %s385 = smul.addr %s384, 16
        %s386 = scalar_lea.vmem [#allocation2], %s385
        // Predicated region
        $region49: #{tpu_custom_call.1} parent=47 // pred_check
          %p387 = pneg %p57
        $region50: #{tpu_custom_call.1} parent=47 // pred_check_branch
          %389 = sbr.rel (%p387) target = $region52
        $region51: #{tpu_custom_call.1} parent=47 // pred_region
          %390 = dma.done %s383, 256
        $region52: #{tpu_custom_call.1} parent=47 // pred_fallthru
          _
        // Predicated region
        $region53: #{tpu_custom_call.1} parent=47 // pred_check
          %p391 = pneg %p78
        $region54: #{tpu_custom_call.1} parent=47 // pred_check_branch
          %393 = sbr.rel (%p391) target = $region56
        $region55: #{tpu_custom_call.1} parent=47 // pred_region
          %394 = dma.done [#allocation6], 2048
        $region56: #{tpu_custom_call.1} parent=47 // pred_fallthru
          _
        // Predicated region
        $region57: #{tpu_custom_call.1} parent=47 // pred_check
          %p395 = pneg %p120
        $region58: #{tpu_custom_call.1} parent=47 // pred_check_branch
          %397 = sbr.rel (%p395) target = $region60
        $region59: #{tpu_custom_call.1} parent=47 // pred_region
          %398 = dma.done [#allocation6], 2048
        $region60: #{tpu_custom_call.1} parent=47 // pred_fallthru
          _
        // Predicated region
        $region61: #{tpu_custom_call.1} parent=47 // pred_check
          %p399 = pneg %p162
        $region62: #{tpu_custom_call.1} parent=47 // pred_check_branch
          %401 = sbr.rel (%p399) target = $region64
        $region63: #{tpu_custom_call.1} parent=47 // pred_region
          %402 = dma.done [#allocation9], 2048
        $region64: #{tpu_custom_call.1} parent=47 // pred_fallthru
          _
        %s403 = sand.u32 %s44, 1
        %s404 = scalar_lea.sflag [#allocation3], %s403
        %s405 = sand.u32 %s44, 1
        %s406 = smul.addr %s405, 16
        %s407 = scalar_lea.vmem [#allocation2], %s406
        %p408 = pneg %p57
        %p409 = pneg %p54
        %p410 = pneg %p78
        %p411 = pneg %p75
        %p412 = pneg %p99
        %p413 = pneg %p96
        %p414 = pneg %p120
        %p415 = pneg %p117
        %p416 = pneg %p141
        %p417 = pneg %p138
        %p418 = pneg %p162
        %p419 = pneg %p159
        %p420 = pneg %p183
        %p421 = pneg %p180
        %p422 = pneg %p209
        %p423 = pneg %p206
        %s424 = sand.u32 %s196, 1
        %s425 = scalar_lea.sflag [#allocation4], %s424
        %s426 = sand.u32 %s196, 1
        %s427 = smul.addr %s426, 16
        %s428 = scalar_lea.vmem [#allocation10], %s427
        %p429 = pneg %p235
        %p430 = pneg %p232
        %s431 = sand.u32 %s36, 1
        %s432 = scalar_lea.sflag [#allocation12], %s431
        %s433 = sand.u32 %s222, 1
        %s434 = smul.addr %s433, 16
        %s435 = scalar_lea.vmem [#allocation11], %s434
        %p436 = pneg %p261
        %p437 = pneg %p258
        %s438 = sand.u32 %s36, 1
        %s439 = scalar_lea.sflag [#allocation12], %s438
        %s440 = sand.u32 %s248, 1
        %s441 = smul.addr %s440, 16
        %s442 = scalar_lea.vmem [#allocation13], %s441
        %p443 = pneg %p287
        %p444 = pneg %p284
        %s445 = sand.u32 %s274, 1
        %s446 = scalar_lea.sflag [#allocation15], %s445
        %s447 = sand.u32 %s274, 1
        %s448 = smul.addr %s447, 8
        %s449 = scalar_lea.vmem [#allocation14], %s448
        %s450 = smul.u32 2, %s36
        %s451 = smul.u32 2, %s36
        %s452 = smul.u32 2, %s36
        %s453 = smul.u32 2, %s36
        %v454 = vld [vmem:[%s386] sm:$0xff]
        %v455 = vld [vmem:[%s386 + $0x8] sm:$0xff]
        %v456 = vld [vmem:[#allocation5] sm:$0xff]
        %v457 = vld [vmem:[#allocation5 + $0x8] sm:$0xff]
        %v458 = vld [vmem:[#allocation5 + $0x10] sm:$0xff]
        %v459 = vld [vmem:[#allocation5 + $0x18] sm:$0xff]
        %v460 = vld [vmem:[#allocation5 + $0x20] sm:$0xff]
        %v461 = vld [vmem:[#allocation5 + $0x28] sm:$0xff]
        %v462 = vld [vmem:[#allocation5 + $0x30] sm:$0xff]
        %v463 = vld [vmem:[#allocation5 + $0x38] sm:$0xff]
        %v464 = vld [vmem:[#allocation5 + $0x40] sm:$0xff]
        %v465 = vld [vmem:[#allocation5 + $0x48] sm:$0xff]
        %v466 = vld [vmem:[#allocation5 + $0x50] sm:$0xff]
        %v467 = vld [vmem:[#allocation5 + $0x58] sm:$0xff]
        %v468 = vld [vmem:[#allocation5 + $0x60] sm:$0xff]
        %v469 = vld [vmem:[#allocation5 + $0x68] sm:$0xff]
        %v470 = vld [vmem:[#allocation5 + $0x70] sm:$0xff]
        %v471 = vld [vmem:[#allocation5 + $0x78] sm:$0xff]
        %v472 = vld [vmem:[%s2] sm:$0x1]
        %v473 = vld [vmem:[#allocation7] sm:$0xff]
        %v474 = vld [vmem:[#allocation7 + $0x8] sm:$0xff]
        %v475 = vld [vmem:[#allocation7 + $0x10] sm:$0xff]
        %v476 = vld [vmem:[#allocation7 + $0x18] sm:$0xff]
        %v477 = vld [vmem:[#allocation7 + $0x20] sm:$0xff]
        %v478 = vld [vmem:[#allocation7 + $0x28] sm:$0xff]
        %v479 = vld [vmem:[#allocation7 + $0x30] sm:$0xff]
        %v480 = vld [vmem:[#allocation7 + $0x38] sm:$0xff]
        %v481 = vld [vmem:[#allocation7 + $0x40] sm:$0xff]
        %v482 = vld [vmem:[#allocation7 + $0x48] sm:$0xff]
        %v483 = vld [vmem:[#allocation7 + $0x50] sm:$0xff]
        %v484 = vld [vmem:[#allocation7 + $0x58] sm:$0xff]
        %v485 = vld [vmem:[#allocation7 + $0x60] sm:$0xff]
        %v486 = vld [vmem:[#allocation7 + $0x68] sm:$0xff]
        %v487 = vld [vmem:[#allocation7 + $0x70] sm:$0xff]
        %v488 = vld [vmem:[#allocation7 + $0x78] sm:$0xff]
        %v489 = vld [vmem:[%s4] sm:$0x1]
        %v490 = vld [vmem:[#allocation8] sm:$0xff]
        %v491 = vld [vmem:[#allocation8 + $0x8] sm:$0xff]
        %v492 = vld [vmem:[#allocation8 + $0x10] sm:$0xff]
        %v493 = vld [vmem:[#allocation8 + $0x18] sm:$0xff]
        %v494 = vld [vmem:[#allocation8 + $0x20] sm:$0xff]
        %v495 = vld [vmem:[#allocation8 + $0x28] sm:$0xff]
        %v496 = vld [vmem:[#allocation8 + $0x30] sm:$0xff]
        %v497 = vld [vmem:[#allocation8 + $0x38] sm:$0xff]
        %v498 = vld [vmem:[#allocation8 + $0x40] sm:$0xff]
        %v499 = vld [vmem:[#allocation8 + $0x48] sm:$0xff]
        %v500 = vld [vmem:[#allocation8 + $0x50] sm:$0xff]
        %v501 = vld [vmem:[#allocation8 + $0x58] sm:$0xff]
        %v502 = vld [vmem:[#allocation8 + $0x60] sm:$0xff]
        %v503 = vld [vmem:[#allocation8 + $0x68] sm:$0xff]
        %v504 = vld [vmem:[#allocation8 + $0x70] sm:$0xff]
        %v505 = vld [vmem:[#allocation8 + $0x78] sm:$0xff]
        %v507 = vlaneseq
        %v508 = vshrl.u32 %v507, 7
        %v509 = vsub.s32 0, %v508
        %v510 = vrot.slane %v472, %v509
        %512 = vmatprep.subr.mxu0 0.0
        %513 = vmatpush1.msra.mxu0 %v471
        %514 = vmatprep.subr.mxu0 0.0
        %515 = vmatpush1.msra.mxu0 %v470
        %516 = vmatprep.subr.mxu0 0.0
        %517 = vmatpush1.msra.mxu0 %v469
        %518 = vmatprep.subr.mxu0 0.0
        %519 = vmatpush1.msra.mxu0 %v468
        %520 = vmatprep.subr.mxu0 0.0
        %521 = vmatpush1.msra.mxu0 %v467
        %522 = vmatprep.subr.mxu0 0.0
        %523 = vmatpush1.msra.mxu0 %v466
        %524 = vmatprep.subr.mxu0 0.0
        %525 = vmatpush1.msra.mxu0 %v465
        %526 = vmatprep.subr.mxu0 0.0
        %527 = vmatpush1.msra.mxu0 %v464
        %528 = vmatprep.subr.mxu0 0.0
        %529 = vmatpush1.msra.mxu0 %v463
        %530 = vmatprep.subr.mxu0 0.0
        %531 = vmatpush1.msra.mxu0 %v462
        %532 = vmatprep.subr.mxu0 0.0
        %533 = vmatpush1.msra.mxu0 %v461
        %534 = vmatprep.subr.mxu0 0.0
        %535 = vmatpush1.msra.mxu0 %v460
        %536 = vmatprep.subr.mxu0 0.0
        %537 = vmatpush1.msra.mxu0 %v459
        %538 = vmatprep.subr.mxu0 0.0
        %539 = vmatpush1.msra.mxu0 %v458
        %540 = vmatprep.subr.mxu0 0.0
        %541 = vmatpush1.msra.mxu0 %v457
        %542 = vmatprep.subr.mxu0 0.0
        %543 = vmatpush1.msra.mxu0 %v456
        %544 = vmatprep.subr.mxu0 0.0
        %545 = vmatpush2.msra.mxu0 0.0
        %546 = vmatprep.subr.mxu0 0.0
        %547 = vmatpush2.msra.mxu0 0.0
        %548 = vmatprep.subr.mxu0 0.0
        %549 = vmatpush2.msra.mxu0 0.0
        %550 = vmatprep.subr.mxu0 0.0
        %551 = vmatpush2.msra.mxu0 0.0
        %552 = vmatprep.subr.mxu0 0.0
        %553 = vmatpush2.msra.mxu0 0.0
        %554 = vmatprep.subr.mxu0 0.0
        %555 = vmatpush2.msra.mxu0 0.0
        %556 = vmatprep.subr.mxu0 0.0
        %557 = vmatpush2.msra.mxu0 0.0
        %558 = vmatprep.subr.mxu0 0.0
        %559 = vmatpush2.msra.mxu0 0.0
        %560 = vmatprep.subr.mxu0 0.0
        %561 = vmatpush2.msra.mxu0 0.0
        %562 = vmatprep.subr.mxu0 0.0
        %563 = vmatpush2.msra.mxu0 0.0
        %564 = vmatprep.subr.mxu0 0.0
        %565 = vmatpush2.msra.mxu0 0.0
        %566 = vmatprep.subr.mxu0 0.0
        %567 = vmatpush2.msra.mxu0 0.0
        %568 = vmatprep.subr.mxu0 0.0
        %569 = vmatpush2.msra.mxu0 0.0
        %570 = vmatprep.subr.mxu0 0.0
        %571 = vmatpush2.msra.mxu0 0.0
        %572 = vmatprep.subr.mxu0 0.0
        %573 = vmatpush2.msra.mxu0 0.0
        %574 = vmatprep.subr.mxu0 0.0
        %575 = vmatpush2.msra.mxu0 0.0
        %576 = vmatprep.mubr.f32.mxu0 0.0
        %577 = vmatmul.mubr.f32.gmra.mxu0 %v454
        %v578 = vpop.f32.mrf.mxu0
        %v579 = vadd.f32 %v510, %v578
        %v580 = vpop.f32.mrf.mxu0
        %581 = vmatprep.mubr.f32.mxu0 0.0
        %582 = vmatmul.mubr.f32.gmra.mxu0 %v455
        %v583 = vpop.f32.mrf.mxu0
        %v584 = vadd.f32 %v510, %v583
        %v585 = vpop.f32.mrf.mxu0
        %586 = vdwg.mxu0
        %v587 = vtanh.pop %v579
        %v588 = vtanh.pop %v584
        %589 = vst [vmem:[%s428] sm:$0xff] %v587
        %590 = vst [vmem:[%s428 + $0x8] sm:$0xff] %v588
        %v592 = vlaneseq
        %v593 = vshrl.u32 %v592, 7
        %v594 = vsub.s32 0, %v593
        %v595 = vrot.slane %v489, %v594
        %597 = vmatprep.subr.mxu0 0.0
        %598 = vmatpush1.msra.mxu0 %v488
        %599 = vmatprep.subr.mxu0 0.0
        %600 = vmatpush1.msra.mxu0 %v487
        %601 = vmatprep.subr.mxu0 0.0
        %602 = vmatpush1.msra.mxu0 %v486
        %603 = vmatprep.subr.mxu0 0.0
        %604 = vmatpush1.msra.mxu0 %v485
        %605 = vmatprep.subr.mxu0 0.0
        %606 = vmatpush1.msra.mxu0 %v484
        %607 = vmatprep.subr.mxu0 0.0
        %608 = vmatpush1.msra.mxu0 %v483
        %609 = vmatprep.subr.mxu0 0.0
        %610 = vmatpush1.msra.mxu0 %v482
        %611 = vmatprep.subr.mxu0 0.0
        %612 = vmatpush1.msra.mxu0 %v481
        %613 = vmatprep.subr.mxu0 0.0
        %614 = vmatpush1.msra.mxu0 %v480
        %615 = vmatprep.subr.mxu0 0.0
        %616 = vmatpush1.msra.mxu0 %v479
        %617 = vmatprep.subr.mxu0 0.0
        %618 = vmatpush1.msra.mxu0 %v478
        %619 = vmatprep.subr.mxu0 0.0
        %620 = vmatpush1.msra.mxu0 %v477
        %621 = vmatprep.subr.mxu0 0.0
        %622 = vmatpush1.msra.mxu0 %v476
        %623 = vmatprep.subr.mxu0 0.0
        %624 = vmatpush1.msra.mxu0 %v475
        %625 = vmatprep.subr.mxu0 0.0
        %626 = vmatpush1.msra.mxu0 %v474
        %627 = vmatprep.subr.mxu0 0.0
        %628 = vmatpush1.msra.mxu0 %v473
        %629 = vmatprep.subr.mxu0 0.0
        %630 = vmatpush2.msra.mxu0 0.0
        %631 = vmatprep.subr.mxu0 0.0
        %632 = vmatpush2.msra.mxu0 0.0
        %633 = vmatprep.subr.mxu0 0.0
        %634 = vmatpush2.msra.mxu0 0.0
        %635 = vmatprep.subr.mxu0 0.0
        %636 = vmatpush2.msra.mxu0 0.0
        %637 = vmatprep.subr.mxu0 0.0
        %638 = vmatpush2.msra.mxu0 0.0
        %639 = vmatprep.subr.mxu0 0.0
        %640 = vmatpush2.msra.mxu0 0.0
        %641 = vmatprep.subr.mxu0 0.0
        %642 = vmatpush2.msra.mxu0 0.0
        %643 = vmatprep.subr.mxu0 0.0
        %644 = vmatpush2.msra.mxu0 0.0
        %645 = vmatprep.subr.mxu0 0.0
        %646 = vmatpush2.msra.mxu0 0.0
        %647 = vmatprep.subr.mxu0 0.0
        %648 = vmatpush2.msra.mxu0 0.0
        %649 = vmatprep.subr.mxu0 0.0
        %650 = vmatpush2.msra.mxu0 0.0
        %651 = vmatprep.subr.mxu0 0.0
        %652 = vmatpush2.msra.mxu0 0.0
        %653 = vmatprep.subr.mxu0 0.0
        %654 = vmatpush2.msra.mxu0 0.0
        %655 = vmatprep.subr.mxu0 0.0
        %656 = vmatpush2.msra.mxu0 0.0
        %657 = vmatprep.subr.mxu0 0.0
        %658 = vmatpush2.msra.mxu0 0.0
        %659 = vmatprep.subr.mxu0 0.0
        %660 = vmatpush2.msra.mxu0 0.0
        %661 = vmatprep.mubr.f32.mxu0 0.0
        %662 = vmatmul.mubr.f32.gmra.mxu0 %v587
        %v663 = vpop.f32.mrf.mxu0
        %v664 = vadd.f32 %v595, %v663
        %v665 = vpop.f32.mrf.mxu0
        %666 = vmatprep.mubr.f32.mxu0 0.0
        %667 = vmatmul.mubr.f32.gmra.mxu0 %v588
        %v668 = vpop.f32.mrf.mxu0
        %v669 = vadd.f32 %v595, %v668
        %v670 = vpop.f32.mrf.mxu0
        %671 = vdwg.mxu0
        %672 = vst [vmem:[%s435] sm:$0xff] %v664
        %673 = vst [vmem:[%s435 + $0x8] sm:$0xff] %v669
        %v674 = vmul.f32 %v587, %v587
        %v675 = vmul.f32 %v588, %v588
        %676 = vadd.xlane.f32.xlu0 %v674
        %v677 = vpop.xlane.xlu0 %676
        %678 = vadd.xlane.f32.xlu0 %v675
        %v679 = vpop.xlane.xlu0 %678
        %680 = vmatprep.subr.mxu0 0.0
        %681 = vmatpush1.msra.mxu0 %v505
        %682 = vmatprep.subr.mxu0 0.0
        %683 = vmatpush1.msra.mxu0 %v504
        %684 = vmatprep.subr.mxu0 0.0
        %685 = vmatpush1.msra.mxu0 %v503
        %686 = vmatprep.subr.mxu0 0.0
        %687 = vmatpush1.msra.mxu0 %v502
        %688 = vmatprep.subr.mxu0 0.0
        %689 = vmatpush1.msra.mxu0 %v501
        %690 = vmatprep.subr.mxu0 0.0
        %691 = vmatpush1.msra.mxu0 %v500
        %692 = vmatprep.subr.mxu0 0.0
        %693 = vmatpush1.msra.mxu0 %v499
        %694 = vmatprep.subr.mxu0 0.0
        %695 = vmatpush1.msra.mxu0 %v498
        %696 = vmatprep.subr.mxu0 0.0
        %697 = vmatpush1.msra.mxu0 %v497
        %698 = vmatprep.subr.mxu0 0.0
        %699 = vmatpush1.msra.mxu0 %v496
        %700 = vmatprep.subr.mxu0 0.0
        %701 = vmatpush1.msra.mxu0 %v495
        %702 = vmatprep.subr.mxu0 0.0
        %703 = vmatpush1.msra.mxu0 %v494
        %704 = vmatprep.subr.mxu0 0.0
        %705 = vmatpush1.msra.mxu0 %v493
        %706 = vmatprep.subr.mxu0 0.0
        %707 = vmatpush1.msra.mxu0 %v492
        %708 = vmatprep.subr.mxu0 0.0
        %709 = vmatpush1.msra.mxu0 %v491
        %710 = vmatprep.subr.mxu0 0.0
        %711 = vmatpush1.msra.mxu0 %v490
        %712 = vmatprep.subr.mxu0 0.0
        %713 = vmatpush2.msra.mxu0 0.0
        %714 = vmatprep.subr.mxu0 0.0
        %715 = vmatpush2.msra.mxu0 0.0
        %716 = vmatprep.subr.mxu0 0.0
        %717 = vmatpush2.msra.mxu0 0.0
        %718 = vmatprep.subr.mxu0 0.0
        %719 = vmatpush2.msra.mxu0 0.0
        %720 = vmatprep.subr.mxu0 0.0
        %721 = vmatpush2.msra.mxu0 0.0
        %722 = vmatprep.subr.mxu0 0.0
        %723 = vmatpush2.msra.mxu0 0.0
        %724 = vmatprep.subr.mxu0 0.0
        %725 = vmatpush2.msra.mxu0 0.0
        %726 = vmatprep.subr.mxu0 0.0
        %727 = vmatpush2.msra.mxu0 0.0
        %728 = vmatprep.subr.mxu0 0.0
        %729 = vmatpush2.msra.mxu0 0.0
        %730 = vmatprep.subr.mxu0 0.0
        %731 = vmatpush2.msra.mxu0 0.0
        %732 = vmatprep.subr.mxu0 0.0
        %733 = vmatpush2.msra.mxu0 0.0
        %734 = vmatprep.subr.mxu0 0.0
        %735 = vmatpush2.msra.mxu0 0.0
        %736 = vmatprep.subr.mxu0 0.0
        %737 = vmatpush2.msra.mxu0 0.0
        %738 = vmatprep.subr.mxu0 0.0
        %739 = vmatpush2.msra.mxu0 0.0
        %740 = vmatprep.subr.mxu0 0.0
        %741 = vmatpush2.msra.mxu0 0.0
        %742 = vmatprep.subr.mxu0 0.0
        %743 = vmatpush2.msra.mxu0 0.0
        %744 = vmatprep.mubr.f32.mxu0 0.0
        %745 = vmatmul.mubr.f32.gmra.mxu0 %v587
        %v746 = vpop.f32.mrf.mxu0
        %v747 = vadd.f32 0.0, %v746
        %v748 = vpop.f32.mrf.mxu0
        %749 = vmatprep.mubr.f32.mxu0 0.0
        %750 = vmatmul.mubr.f32.gmra.mxu0 %v588
        %v751 = vpop.f32.mrf.mxu0
        %v752 = vadd.f32 0.0, %v751
        %v753 = vpop.f32.mrf.mxu0
        %754 = vdwg.mxu0
        %v755 = vld [vmem:[%s6] sm:$0x1]
        %v757 = vlaneseq
        %v758 = vshrl.u32 %v757, 7
        %v759 = vsub.s32 0, %v758
        %v760 = vrot.slane %v755, %v759
        %v762 = vadd.f32 %v677, %v760
        %v763 = vadd.f32 %v679, %v760
        %v764 = vmul.f32 %v747, 2.0
        %v765 = vmul.f32 %v752, 2.0
        %v766 = vsub.f32 %v762, %v764
        %v767 = vsub.f32 %v763, %v765
        %v768 = vmax.f32 %v766, 0.0
        %v769 = vmax.f32 %v767, 0.0
        %v770 = vrsqrt.pop %v768
        %v771 = vmul.f32 %v768, %v770
        %vm772 = vcmp.eq.f32.partialorder %v768, inf
        %v773 = vsel %vm772, %v768, %v771
        %vm774 = vcmp.eq.f32.partialorder %v768, 0.0
        %v775 = vand.u32 %v768, 2147483648
        %v776 = vsel %vm774, %v775, %v773
        %v777 = vrsqrt.pop %v769
        %v778 = vmul.f32 %v769, %v777
        %vm779 = vcmp.eq.f32.partialorder %v769, inf
        %v780 = vsel %vm779, %v769, %v778
        %vm781 = vcmp.eq.f32.partialorder %v769, 0.0
        %v782 = vand.u32 %v769, 2147483648
        %v783 = vsel %vm781, %v782, %v780
        %v784 = vadd.f32 %v776, 1.0
        %v785 = vadd.f32 %v783, 1.0
        %v786 = vrcp.pop %v784
        %v787 = vrcp.pop %v785
        %vm788 = vcmp.ne.f32.partialorder %v786, %v786
        %vm789 = vcmp.ne.f32.partialorder %v787, %v787
        %v790 = vsel %vm788, 0.0, %v786
        %v791 = vsel %vm789, 0.0, %v787
        %792 = vadd.xlane.f32.xlu0 %v790
        %v793 = vpop.xlane.xlu0 %792
        %794 = vadd.xlane.f32.xlu0 %v791
        %v795 = vpop.xlane.xlu0 %794
        %v796 = vrcp.pop %v793
        %v797 = vrcp.pop %v795
        %v798 = vmul.f32 %v786, %v796
        %v799 = vmul.f32 %v787, %v797
        %800 = vst [vmem:[%s442] sm:$0xff] %v798
        %801 = vst [vmem:[%s442 + $0x8] sm:$0xff] %v799
        %v802 = vlaneseq
        %v803 = vshrl.u32 %v802, 7
        %v804 = vadd.s32 %v803, 8
        %s805 = smul.u32 %s36, 16
        %v806 = vstv %s805
        %v807 = vadd.s32 %v803, %v806
        %v808 = vadd.s32 %v804, %v806
        %vm809 = vcmp.lt.s32.totalorder %v807, 20
        %vm810 = vcmp.lt.s32.totalorder %v808, 20
        %v811 = vsel %vm809, %v798, 0.0
        %v812 = vsel %vm810, %v799, 0.0
        %v813 = vadd.f32 %v811, %v812
        %v814 = vrot.slane %v813, 4
        %v815 = vadd.f32 %v813, %v814
        %v816 = vrot.slane %v815, 2
        %v817 = vadd.f32 %v815, %v816
        %v818 = vrot.slane %v817, 1
        %v819 = vadd.f32 %v817, %v818
        %vm820 = vcmp.eq.s32.totalorder %v803, 0
        %v821 = vsel %vm820, %v819, 0.0
        %822 = vst [vmem:[%s449] sm:$0xff] %v821
        %s823 = sand.u32 %s196, 1
        %s824 = scalar_lea.sflag [#allocation4], %s823
        %s825 = sand.u32 %s196, 1
        %s826 = smul.addr %s825, 16
        %s827 = scalar_lea.vmem [#allocation10], %s826
        %s828 = sand.u32 %s36, 1
        %s829 = scalar_lea.sflag [#allocation12], %s828
        %s830 = sand.u32 %s222, 1
        %s831 = smul.addr %s830, 16
        %s832 = scalar_lea.vmem [#allocation11], %s831
        %s833 = sand.u32 %s36, 1
        %s834 = scalar_lea.sflag [#allocation12], %s833
        %s835 = sand.u32 %s248, 1
        %s836 = smul.addr %s835, 16
        %s837 = scalar_lea.vmem [#allocation13], %s836
        %s838 = sand.u32 %s274, 1
        %s839 = scalar_lea.sflag [#allocation15], %s838
        %s840 = sand.u32 %s274, 1
        %s841 = smul.addr %s840, 8
        %s842 = scalar_lea.vmem [#allocation14], %s841
        // Predicated region
        $region65: #{tpu_custom_call.1} parent=47 // pred_check
          %p843 = pneg %p206
        $region66: #{tpu_custom_call.1} parent=47 // pred_check_branch
          %845 = sbr.rel (%p843) target = $region68
        $region67: #{tpu_custom_call.1} parent=47 // pred_region
          %s846 = smul.u32 2, %s36
          %s848 = ssub.s32 256, 256
          %849 = vsyncadd %s824, %s848
          %s850 = smul.addr %s846, 128
          %s851 = scalar_lea.hbm %s7, %s850
          %s852 = sshll.u32 %s827, 4
          %s853 = int_to_ptr.vmem [resolvable:$true] %s852
          %858 = dma.vmem_to_hbm [thread:$0]  %s853, 256, %s851, %s824, 128, 128, 8
        $region68: #{tpu_custom_call.1} parent=47 // pred_fallthru
          _
        // Predicated region
        $region69: #{tpu_custom_call.1} parent=47 // pred_check
          %p859 = pneg %p232
        $region70: #{tpu_custom_call.1} parent=47 // pred_check_branch
          %861 = sbr.rel (%p859) target = $region72
        $region71: #{tpu_custom_call.1} parent=47 // pred_region
          %s862 = smul.u32 2, %s36
          %s864 = ssub.s32 256, 256
          %865 = vsyncadd %s829, %s864
          %s866 = smul.addr %s862, 128
          %s867 = scalar_lea.hbm %s8, %s866
          %s868 = sshll.u32 %s832, 4
          %s869 = int_to_ptr.vmem [resolvable:$true] %s868
          %874 = dma.vmem_to_hbm [thread:$0]  %s869, 256, %s867, %s829, 128, 128, 8
        $region72: #{tpu_custom_call.1} parent=47 // pred_fallthru
          _
        // Predicated region
        $region73: #{tpu_custom_call.1} parent=47 // pred_check
          %p875 = pneg %p258
        $region74: #{tpu_custom_call.1} parent=47 // pred_check_branch
          %877 = sbr.rel (%p875) target = $region76
        $region75: #{tpu_custom_call.1} parent=47 // pred_region
          %s878 = smul.u32 2, %s36
          %s880 = ssub.s32 256, 256
          %881 = vsyncadd %s834, %s880
          %s882 = smul.addr %s878, 128
          %s883 = scalar_lea.hbm %s9, %s882
          %s884 = sshll.u32 %s837, 4
          %s885 = int_to_ptr.vmem [resolvable:$true] %s884
          %890 = dma.vmem_to_hbm [thread:$0]  %s885, 256, %s883, %s834, 128, 128, 8
        $region76: #{tpu_custom_call.1} parent=47 // pred_fallthru
          _
        // Predicated region
        $region77: #{tpu_custom_call.1} parent=47 // pred_check
          %p891 = pneg %p284
        $region78: #{tpu_custom_call.1} parent=47 // pred_check_branch
          %893 = sbr.rel (%p891) target = $region80
        $region79: #{tpu_custom_call.1} parent=47 // pred_region
          %s895 = ssub.s32 128, 128
          %896 = vsyncadd %s839, %s895
          %s897 = smul.addr %s36, 128
          %s898 = scalar_lea.hbm %s10, %s897
          %s900 = sshll.u32 %s842, 4
          %s901 = int_to_ptr.vmem [resolvable:$true] %s900
          %903 = dma.vmem_to_hbm [thread:$0]  %s901, 128, %s898, %s839
        $region80: #{tpu_custom_call.1} parent=47 // pred_fallthru
          _
      $region48: #{tpu_custom_call.1} parent=5 // pred_fallthru
        _
      %p904 = scmp.le.s32.totalorder 2, %s31
      // Predicated region
      $region81: #{tpu_custom_call.1} parent=5 // pred_check
        %p905 = pneg %p904
      $region82: #{tpu_custom_call.1} parent=5 // pred_check_branch
        %907 = sbr.rel (%p905) target = $region84
      $region83: #{tpu_custom_call.1} parent=5 // pred_region
        %s908 = ssub.s32 %s31, 2
        // Predicated region
        $region85: #{tpu_custom_call.1} parent=83 // pred_check
          %p909 = pneg %p212
        $region86: #{tpu_custom_call.1} parent=83 // pred_check_branch
          %911 = sbr.rel (%p909) target = $region88
        $region87: #{tpu_custom_call.1} parent=83 // pred_region
          %s912 = sand.u32 %s197, 1
          %s913 = scalar_lea.sflag [#allocation4], %s912
          %s914 = sand.u32 %s197, 1
          %s915 = smul.addr %s914, 16
          %s916 = scalar_lea.vmem [#allocation10], %s915
          %917 = dma.done %s913, 256
        $region88: #{tpu_custom_call.1} parent=83 // pred_fallthru
          _
        // Predicated region
        $region89: #{tpu_custom_call.1} parent=83 // pred_check
          %p918 = pneg %p238
        $region90: #{tpu_custom_call.1} parent=83 // pred_check_branch
          %920 = sbr.rel (%p918) target = $region92
        $region91: #{tpu_custom_call.1} parent=83 // pred_region
          %s921 = sand.u32 %s37, 1
          %s922 = scalar_lea.sflag [#allocation12], %s921
          %s923 = sand.u32 %s223, 1
          %s924 = smul.addr %s923, 16
          %s925 = scalar_lea.vmem [#allocation11], %s924
          %926 = dma.done %s922, 256
        $region92: #{tpu_custom_call.1} parent=83 // pred_fallthru
          _
        // Predicated region
        $region93: #{tpu_custom_call.1} parent=83 // pred_check
          %p927 = pneg %p264
        $region94: #{tpu_custom_call.1} parent=83 // pred_check_branch
          %929 = sbr.rel (%p927) target = $region96
        $region95: #{tpu_custom_call.1} parent=83 // pred_region
          %s930 = sand.u32 %s37, 1
          %s931 = scalar_lea.sflag [#allocation12], %s930
          %s932 = sand.u32 %s249, 1
          %s933 = smul.addr %s932, 16
          %s934 = scalar_lea.vmem [#allocation13], %s933
          %935 = dma.done %s931, 256
        $region96: #{tpu_custom_call.1} parent=83 // pred_fallthru
          _
        // Predicated region
        $region97: #{tpu_custom_call.1} parent=83 // pred_check
          %p936 = pneg %p290
        $region98: #{tpu_custom_call.1} parent=83 // pred_check_branch
          %938 = sbr.rel (%p936) target = $region100
        $region99: #{tpu_custom_call.1} parent=83 // pred_region
          %s939 = sand.u32 %s275, 1
          %s940 = scalar_lea.sflag [#allocation15], %s939
          %s941 = sand.u32 %s275, 1
          %s942 = smul.addr %s941, 8
          %s943 = scalar_lea.vmem [#allocation14], %s942
          %944 = dma.done %s940, 128
        $region100: #{tpu_custom_call.1} parent=83 // pred_fallthru
          _
      $region84: #{tpu_custom_call.1} parent=5 // pred_fallthru
        _
    $region6: #{tpu_custom_call.1} parent=1 // loop_footer
      %s35 = sadd.s32 1, %s31
    $region7: #{tpu_custom_call.1} parent=1 // loop_footer_branch
      %30 = sbr.rel target = $region3
    $region8: #{tpu_custom_call.1} parent=1 // loop_exit
      _
    %945 = vsyncpa [#allocation3], 1
    %s946 = scalar_lea.sflag [#allocation3], 1
    %947 = vsyncpa %s946, 1
    %948 = vsyncpa [#allocation6], 1
    %949 = vsyncpa [#allocation9], 1
    %950 = vsyncpa [#allocation4], 1
    %s951 = scalar_lea.sflag [#allocation4], 1
    %952 = vsyncpa %s951, 1
    %953 = vsyncpa [#allocation12], 1
    %s954 = scalar_lea.sflag [#allocation12], 1
    %955 = vsyncpa %s954, 1
    %956 = vsyncpa [#allocation15], 1
    %s957 = scalar_lea.sflag [#allocation15], 1
    %958 = vsyncpa %s957, 1

</llo_original>
